<compile_context>
chip_gen: v6e
topology: v6e:2x2x1
jax: 0.10.0
libtpu: 0.0.40
codegen_flags: <defaults>
</compile_context>

<pallas_src>
import functools

import jax
import jax.numpy as jnp
from jax.experimental import pallas as pl
from jax.experimental.pallas import tpu as pltpu


_MATMUL_MAX_C = 256        # above this the one-hot matmul gather is O(B*C^2) waste
_LANE_BLOCK = (8, 128)     # lane-dense per-tile partial output block
_PARTIAL_ELEMS = _LANE_BLOCK[0] * _LANE_BLOCK[1]


def _log_softmax_masked(x_f32, tile_row0, total_b):
    """Stable log-softmax over the last dim; rows >= total_b are zeroed.

    Zeroing with jnp.where also squashes any NaN/Inf produced from garbage data
    in the padded tail of the last batch tile.
    """
    tb, c = x_f32.shape
    m = jnp.max(x_f32, axis=-1, keepdims=True)
    shifted = x_f32 - m
    lse = jnp.log(jnp.sum(jnp.exp(shifted), axis=-1, keepdims=True))
    log_probs = shifted - lse
    row_ids = tile_row0 + jax.lax.broadcasted_iota(jnp.int32, (tb, c), 0)
    return jnp.where(row_ids < total_b, log_probs, 0.0)


def _loss_kernel_matmul(out_ref, tgt_ref, sim_ref, partial_ref, *, total_b):
    """Small-C path: gather similarity rows with a one-hot @ sim MXU matmul."""
    i = pl.program_id(0)
    tb, c = out_ref.shape

    log_probs = _log_softmax_masked(out_ref[...].astype(jnp.float32), i * tb, total_b)

    # one_hot(target) @ sim, exact in f32. Padded rows contribute 0 because
    # log_probs is already zeroed there (their one-hot row is finite 0/1 data).
    # Out-of-range targets yield an all-zero one-hot row (contribution 0),
    # unlike PyTorch indexing which would raise.
    tgt = tgt_ref[...]                                                 # (tb, 1) int32
    class_ids = jax.lax.broadcasted_iota(jnp.int32, (tb, c), 1)
    onehot = (class_ids == tgt).astype(jnp.float32)
    sim_rows = jnp.dot(onehot, sim_ref[...].astype(jnp.float32),
                       preferred_element_type=jnp.float32)             # (tb, c)

    partial = jnp.sum(log_probs * sim_rows)
    inv = -1.0 / (total_b * _PARTIAL_ELEMS)
    partial_ref[...] = jnp.full(partial_ref.shape, partial * inv, jnp.float32)


def _loss_kernel_gather(tgt_smem, out_ref, sim_ref, partial_ref, rows_ref, *, total_b):
    """Large-C path: true row gather from the VMEM-resident similarity matrix."""
    i = pl.program_id(0)
    tb, c = out_ref.shape

    def gather_row(b, carry):
        # Clamp the batch position (padded tail of the last tile would read the
        # target array out of bounds) and the class index (an out-of-range
        # target would otherwise OOB-read VMEM; PyTorch would raise instead).
        pos = jnp.minimum(i * tb + b, total_b - 1)
        t = jnp.clip(tgt_smem[pos], 0, c - 1)
        rows_ref[pl.ds(b, 1), :] = sim_ref[pl.ds(t, 1), :]
        return carry

    jax.lax.fori_loop(0, tb, gather_row, 0)

    log_probs = _log_softmax_masked(out_ref[...].astype(jnp.float32), i * tb, total_b)
    partial = jnp.sum(log_probs * rows_ref[...].astype(jnp.float32))
    inv = -1.0 / (total_b * _PARTIAL_ELEMS)
    partial_ref[...] = jnp.full(partial_ref.shape, partial * inv, jnp.float32)


def _vmem_budget_bytes():
    """Usable scoped-VMEM budget with generation-aware headroom."""
    try:
        cap = int(pltpu.get_tpu_info().vmem_capacity_bytes)
    except Exception:
        cap = 64 * 1024 * 1024                       # conservative (v7x-sized)
    # Leave headroom for compiler scratch / pipelining bookkeeping:
    #   64 MiB (v7x) -> ~54 MiB ;  128 MiB (v5e/v6e) -> ~109 MiB.
    usable = min(cap - (8 << 20), int(cap * 0.85))
    return max(usable, 16 << 20)


def _choose_tile_b(batch, c, in_itemsize, sim_bytes, mode, budget):
    """Largest batch tile whose live VMEM footprint fits the budget."""
    fixed = sim_bytes + 2 * _PARTIAL_ELEMS * 4                # resident sim + out blk
    avail = max(budget - fixed - (2 << 20), 1 << 20)          # extra 2 MiB slack
    # Per batch row: double-buffered input tile in its real dtype + ~4 live
    # (tb, C) f32 temporaries, plus either the one-hot temp and the lane-padded
    # (tb, 1)->(tb, 128) target column (matmul path) or the gathered-rows
    # scratch (gather path).
    per_row = 2 * c * in_itemsize + 4 * c * 4
    if mode == "matmul":
        per_row += c * 4 + 2 * 128 * 4
    else:
        per_row += c * 4
    tb = int(avail // per_row)
    tb = max(8, min(tb, 8192))        # big tiles amortize ~0.35 us/step overhead
    tb -= tb % 8
    if tb >= batch:
        if batch >= 16:
            # Keep at least two grid steps so v7x's second TensorCore has work.
            tb = 8 * ((batch + 15) // 16)      # round_up8(ceil(batch / 2))
        else:
            tb = batch                         # single full-extent block (legal)
    return tb


def custom_loss(outputs, target, similarity_matrix, *, tile_b=None, gather_mode=None):
    """Pallas equivalent of CustomLossFunction.forward(outputs, target)."""
    B, C = outputs.shape
    assert similarity_matrix.shape == (C, C)

    mode = gather_mode if gather_mode is not None else (
        "matmul" if C <= _MATMUL_MAX_C else "loop")
    budget = _vmem_budget_bytes()
    sim_bytes = C * C * similarity_matrix.dtype.itemsize       # single-buffered
    tb = tile_b if tile_b is not None else _choose_tile_b(
        B, C, outputs.dtype.itemsize, sim_bytes, mode, budget)
    num_tiles = pl.cdiv(B, tb)

    out_shape = jax.ShapeDtypeStruct((num_tiles,) + _LANE_BLOCK, jnp.float32)
    compiler_params = pltpu.CompilerParams(
        dimension_semantics=("parallel",),        # lets v7x split tiles over 2 TCs
        vmem_limit_bytes=int(budget),
    )

    if mode == "matmul":
        kernel = functools.partial(_loss_kernel_matmul, total_b=B)
        target_col = target.astype(jnp.int32).reshape(B, 1)
        partials = pl.pallas_call(
            kernel,
            out_shape=out_shape,
            grid_spec=pltpu.PrefetchScalarGridSpec(
                num_scalar_prefetch=0,
                grid=(num_tiles,),
                in_specs=[
                    pl.BlockSpec((tb, C), lambda i: (i, 0)),       # outputs tile
                    pl.BlockSpec((tb, 1), lambda i: (i, 0)),       # target column
                    pl.BlockSpec((C, C), lambda i: (0, 0),         # resident sim
                                 pipeline_mode=pl.Buffered(1)),
                ],
                out_specs=pl.BlockSpec((1,) + _LANE_BLOCK, lambda i: (i, 0, 0)),
            ),
            compiler_params=compiler_params,
        )(outputs, target_col, similarity_matrix)
    else:
        kernel = functools.partial(_loss_kernel_gather, total_b=B)
        partials = pl.pallas_call(
            kernel,
            out_shape=out_shape,
            grid_spec=pltpu.PrefetchScalarGridSpec(
                num_scalar_prefetch=1,                             # targets -> SMEM
                grid=(num_tiles,),
                in_specs=[
                    pl.BlockSpec((tb, C), lambda i, tgt: (i, 0)),  # outputs tile
                    pl.BlockSpec((C, C), lambda i, tgt: (0, 0),    # resident sim
                                 pipeline_mode=pl.Buffered(1)),
                ],
                out_specs=pl.BlockSpec((1,) + _LANE_BLOCK, lambda i, tgt: (i, 0, 0)),
                scratch_shapes=[pltpu.VMEM((tb, C), similarity_matrix.dtype)],
            ),
            compiler_params=compiler_params,
        )(target.astype(jnp.int32), outputs, similarity_matrix)

    # Per-tile partials already carry the -1/B normalization, spread exactly
    # (division by 2^10) over the lane-dense 8x128 block; padded rows contributed
    # exactly 0, so a plain full-array sum finishes the reduction.
    return jnp.sum(partials)


def _reference_loss(outputs, target, similarity_matrix):
    # Pure-JAX reference matching the PyTorch forward exactly.
    pred = jax.nn.log_softmax(outputs.astype(jnp.float32), axis=-1)
    similarity_row = similarity_matrix[target].astype(jnp.float32)
    tensor = pred * similarity_row
    sum_over_columns = jnp.sum(tensor, axis=1)
    average_over_rows = jnp.mean(sum_over_columns)
    return -average_over_rows


if __name__ == "__main__":
    key = jax.random.PRNGKey(0)
    k_out, k_sim, k_tgt = jax.random.split(key, 3)

    # Shapes implied by the module: outputs [batch, num_classes], sim [C, C].
    B, C = 8, 32
    outputs = jax.random.normal(k_out, (B, C), dtype=jnp.float32)
    similarity_matrix = jax.random.uniform(k_sim, (C, C), dtype=jnp.float32)
    target = jax.random.randint(k_tgt, (B,), 0, C, dtype=jnp.int32)

    loss = jax.block_until_ready(custom_loss(outputs, target, similarity_matrix))
    ref = _reference_loss(outputs, target, similarity_matrix)
    assert jnp.allclose(loss, ref, rtol=1e-5, atol=1e-5), (loss, ref)

    # Multi-tile path via the auto tile chooser (B=20 -> 2 tiles, padded tail).
    B2 = 20
    k_out2, k_tgt2 = jax.random.split(jax.random.PRNGKey(1))
    outputs2 = jax.random.normal(k_out2, (B2, C), dtype=jnp.float32)
    target2 = jax.random.randint(k_tgt2, (B2,), 0, C, dtype=jnp.int32)
    ref2 = _reference_loss(outputs2, target2, similarity_matrix)

    loss2 = jax.block_until_ready(custom_loss(outputs2, target2, similarity_matrix))
    assert jnp.allclose(loss2, ref2, rtol=1e-5, atol=1e-5), (loss2, ref2)

    # Explicit small tiles on the matmul path (3 tiles, masking, true-B norm).
    loss3 = jax.block_until_ready(
        custom_loss(outputs2, target2, similarity_matrix, tile_b=8))
    assert jnp.allclose(loss3, ref2, rtol=1e-5, atol=1e-5), (loss3, ref2)

    # Force the in-kernel row-gather path (the one used automatically once
    # C > 256): SMEM scalar-prefetched targets + fori_loop gather + padding.
    loss4 = jax.block_until_ready(
        custom_loss(outputs2, target2, similarity_matrix, tile_b=8,
                    gather_mode="loop"))
    assert jnp.allclose(loss4, ref2, rtol=1e-5, atol=1e-5), (loss4, ref2)

    print("KERNEL_OK")
</pallas_src>

<mosaic_0001>
module attributes {stable_mosaic.version = 11 : i64} {
  func.func @_loss_kernel_matmul(%arg0: i32, %arg1: memref<8x32xf32, #tpu.memory_space<vmem>>, %arg2: memref<8x1xi32, #tpu.memory_space<vmem>>, %arg3: memref<32x32xf32, #tpu.memory_space<vmem>>, %arg4: memref<1x8x128xf32, #tpu.memory_space<vmem>>) attributes {dimension_semantics = [#tpu.dimension_semantics<parallel>], iteration_bounds = array<i64: 1>, scalar_prefetch = 0 : i64, scratch_operands = 0 : i64, tpu.core_type = #tpu.core_type<tc>, window_params = [{transform_indices = @transform_0, window_bounds = array<i64: 8, 32>}, {transform_indices = @transform_1, window_bounds = array<i64: 8, 1>}, {pipeline_mode = #tpu.pipeline_mode<synchronous>, transform_indices = @transform_2, window_bounds = array<i64: 32, 32>}, {transform_indices = @transform_3, window_bounds = array<i64: 1, 8, 128>}]} {
    %c0 = arith.constant 0 : index
    %c0_0 = arith.constant 0 : index
    %0 = vector.load %arg1[%c0, %c0_0] : memref<8x32xf32, #tpu.memory_space<vmem>>, vector<8x32xf32>
    %c8_i32 = arith.constant 8 : i32
    %1 = arith.muli %arg0, %c8_i32 : i32
    %cst = arith.constant dense<0xFF800000> : vector<8xf32>
    %2 = vector.multi_reduction <maximumf>, %0, %cst [1] : vector<8x32xf32> to vector<8xf32>
    %3 = vector.shape_cast %2 : vector<8xf32> to vector<8x1xf32>
    %4 = vector.broadcast %3 : vector<8x1xf32> to vector<8x32xf32>
    %5 = arith.subf %0, %4 : vector<8x32xf32>
    %6 = math.exp %5 : vector<8x32xf32>
    %cst_1 = arith.constant dense<0.000000e+00> : vector<8xf32>
    %7 = vector.multi_reduction <add>, %6, %cst_1 [1] : vector<8x32xf32> to vector<8xf32>
    %8 = vector.shape_cast %7 : vector<8xf32> to vector<8x1xf32>
    %9 = math.log %8 : vector<8x1xf32>
    %10 = vector.broadcast %9 : vector<8x1xf32> to vector<8x32xf32>
    %11 = arith.subf %5, %10 : vector<8x32xf32>
    %12 = tpu.iota {dimensions = array<i32: 0>} : vector<8x32xi32>
    %13 = vector.broadcast %1 : i32 to vector<8x32xi32>
    %14 = arith.addi %13, %12 : vector<8x32xi32>
    %c8_i32_2 = arith.constant 8 : i32
    %15 = vector.broadcast %c8_i32_2 : i32 to vector<8x32xi32>
    %16 = arith.cmpi slt, %14, %15 : vector<8x32xi32>
    %cst_3 = arith.constant 0.000000e+00 : f32
    %17 = vector.broadcast %cst_3 : f32 to vector<8x32xf32>
    %18 = arith.select %16, %11, %17 : vector<8x32xi1>, vector<8x32xf32>
    %c0_4 = arith.constant 0 : index
    %c0_5 = arith.constant 0 : index
    %19 = vector.load %arg2[%c0_4, %c0_5] : memref<8x1xi32, #tpu.memory_space<vmem>>, vector<8x1xi32>
    %20 = tpu.iota {dimensions = array<i32: 1>} : vector<8x32xi32>
    %21 = vector.broadcast %19 : vector<8x1xi32> to vector<8x32xi32>
    %22 = arith.cmpi eq, %20, %21 : vector<8x32xi32>
    %23 = arith.extui %22 : vector<8x32xi1> to vector<8x32xi32>
    %24 = arith.sitofp %23 : vector<8x32xi32> to vector<8x32xf32>
    %c0_6 = arith.constant 0 : index
    %c0_7 = arith.constant 0 : index
    %25 = vector.load %arg3[%c0_6, %c0_7] : memref<32x32xf32, #tpu.memory_space<vmem>>, vector<32x32xf32>
    %cst_8 = arith.constant dense<0.000000e+00> : vector<8x32xf32>
    %26 = tpu.matmul %24, %25, %cst_8 {dimension_numbers = #tpu.dot_dimension_numbers<[1], [0], [0], [1], [0, 0, 1, 1], [], []>} : vector<8x32xf32>, vector<32x32xf32>, vector<8x32xf32> -> vector<8x32xf32>
    %27 = arith.mulf %18, %26 : vector<8x32xf32>
    %28 = vector.shape_cast %27 : vector<8x32xf32> to vector<1x8x32xf32>
    %cst_9 = arith.constant dense<0.000000e+00> : vector<1xf32>
    %29 = vector.multi_reduction <add>, %28, %cst_9 [1, 2] : vector<1x8x32xf32> to vector<1xf32>
    %30 = vector.shape_cast %29 : vector<1xf32> to vector<1x1x1xf32>
    %31 = vector.extract %30[0, 0, 0] : f32 from vector<1x1x1xf32>
    %cst_10 = arith.constant -1.22070313E-4 : f32
    %32 = arith.mulf %31, %cst_10 : f32
    %33 = vector.broadcast %32 : f32 to vector<1x8x128xf32>
    %c0_11 = arith.constant 0 : index
    %c0_12 = arith.constant 0 : index
    %c0_13 = arith.constant 0 : index
    %34 = vector.load %arg4[%c0_11, %c0_12, %c0_13] : memref<1x8x128xf32, #tpu.memory_space<vmem>>, vector<1x8x128xf32>
    tpu.vector_store %arg4[%c0_11, %c0_12, %c0_13], %33 {strides = array<i32>} : memref<1x8x128xf32, #tpu.memory_space<vmem>>, vector<1x8x128xf32>,
    return
  }
  func.func @transform_0(%arg0: i32) -> (i32, i32) {
    %c0_i32 = arith.constant 0 : i32
    %c0_i32_0 = arith.constant 0 : i32
    return %arg0, %c0_i32 : i32, i32
  }
  func.func @transform_1(%arg0: i32) -> (i32, i32) {
    %c0_i32 = arith.constant 0 : i32
    %c0_i32_0 = arith.constant 0 : i32
    return %arg0, %c0_i32 : i32, i32
  }
  func.func @transform_2(%arg0: i32) -> (i32, i32) {
    %c0_i32 = arith.constant 0 : i32
    %c0_i32_0 = arith.constant 0 : i32
    %c0_i32_1 = arith.constant 0 : i32
    return %c0_i32, %c0_i32_0 : i32, i32
  }
  func.func @transform_3(%arg0: i32) -> (i32, i32, i32) {
    %c0_i32 = arith.constant 0 : i32
    %c0_i32_0 = arith.constant 0 : i32
    %c0_i32_1 = arith.constant 0 : i32
    return %arg0, %c0_i32, %c0_i32_0 : i32, i32, i32
  }
}

</mosaic_0001>

<llo_original>
// kernel: tpu_custom_call.1
$region0: #{tpu_custom_call.1}
  #allocation0 [shape = 'u32[]', space=smem, size = 0x4, offset = 0x4, fixed_abs, tag = 'smem constant byte address 0x4 - core index']
  #allocation1 [shape = 'u32[144,128]{1,0:T(1,128)}', space=vmem, size = 0x12000, scoped, tag = 'internal scratch']
  %s0 = inlined_call_operand.vmem [shape: f32[8,32], index: 0, kind: input, shape index: {}]
  %s1 = inlined_call_operand.vmem [shape: s32[8,1], index: 1, kind: input, shape index: {}]
  %s2 = inlined_call_operand.hbm [shape: f32[32,32], index: 2, kind: input, shape index: {}]
  %s3 = inlined_call_operand.hbm [shape: f32[1,8,128], index: 3, kind: output, shape index: {}]
  %s4 = sld [smem:[#allocation0]]
  $region26: #{tpu_custom_call.1} parent=0
    _
  %s6 = ssub.s32 1, %s4
  %s7 = scalar_select 0, %s6, %s4
  $region1: #{tpu_custom_call.1} parent=0
    #allocation2 [shape = 'u8[16384]{0}', space=vmem, size = 0x4000, scoped, tag = 'input window, operand 2, single buffered']
    #allocation3 [shape = 's32[1]{0}', space=sflag, size = 0x4, scoped, tag = 'scoped memory for tpu_custom_call.1']
    #allocation4 [shape = 's32[1]{0}', space=sflag, size = 0x4, scoped, tag = 'scoped memory for tpu_custom_call.1']
    #allocation5 [shape = 'u8[4096]{0}', space=vmem, size = 0x1000, scoped, tag = 'output window, operand 0, single buffered']
    %8 = vsyncpa [#allocation3], 0
    %9 = vsyncpa [#allocation4], 0
    // Predicated region
    $region2: #{tpu_custom_call.1} parent=1 // pred_check
      _
    $region3: #{tpu_custom_call.1} parent=1 // pred_check_branch
      %11 = sbr.rel (0) target = $region5
    $region4: #{tpu_custom_call.1} parent=1 // pred_region
      _
    $region5: #{tpu_custom_call.1} parent=1 // pred_fallthru
      _
    // Predicated region
    $region6: #{tpu_custom_call.1} parent=1 // pred_check
      _
    $region7: #{tpu_custom_call.1} parent=1 // pred_check_branch
      %13 = sbr.rel (0) target = $region9
    $region8: #{tpu_custom_call.1} parent=1 // pred_region
      _
    $region9: #{tpu_custom_call.1} parent=1 // pred_fallthru
      _
    // Predicated region
    $region10: #{tpu_custom_call.1} parent=1 // pred_check
      _
    $region11: #{tpu_custom_call.1} parent=1 // pred_check_branch
      %15 = sbr.rel (0) target = $region13
    $region12: #{tpu_custom_call.1} parent=1 // pred_region
      %s17 = ssub.s32 512, 512
      %18 = vsyncadd [#allocation3], %s17
      %s19 = sshll.u32 [#allocation2], 4
      %s20 = int_to_ptr.vmem [resolvable:$true] %s19
      %25 = dma.hbm_to_vmem [thread:$0]  %s2, 512, %s20, [#allocation3], 128, 128, 8
    $region13: #{tpu_custom_call.1} parent=1 // pred_fallthru
      _
    // Predicated region
    $region14: #{tpu_custom_call.1} parent=1 // pred_check
      _
    $region15: #{tpu_custom_call.1} parent=1 // pred_check_branch
      %27 = sbr.rel (0) target = $region17
    $region16: #{tpu_custom_call.1} parent=1 // pred_region
      %28 = dma.done [#allocation3], 512
    $region17: #{tpu_custom_call.1} parent=1 // pred_fallthru
      _
    %v29 = vld [vmem:[%s0] sm:$0xff]
    %s30 = smul.u32 0, 8
    %vm31 = vcmask 261120
    %v32 = vsel %vm31, %v29, -inf
    %33 = vmax.xlane.f32.xlu0 %v32
    %v34 = vpop.xlane.xlu0 %33
    %v35 = vsub.f32 %v29, %v34
    %v36 = vmul.f32 %v35, 1.442695
    %v37 = vpow.pop %v36
    %v38 = vsel %vm31, %v37, 0.0
    %39 = vadd.xlane.f32.xlu0 %v38
    %v40 = vpop.xlane.xlu0 %39
    %v41 = vlog2.pop %v40
    %v42 = vmul.f32 %v41, 0.6931472
    %v43 = vsub.f32 %v35, %v42
    %v44 = vlaneseq
    %v45 = vshrl.u32 %v44, 7
    %v46 = vstv %s30
    %v47 = vadd.s32 %v46, %v45
    %vm48 = vcmp.lt.s32.totalorder %v47, 8
    %v49 = vsel %vm48, %v43, 0.0
    %v50 = vld [vmem:[%s1] sm:$0xff]
    %v51 = vlaneseq
    %v52 = vand.u32 %v51, 127
    %53 = vset.pattern.permute.xlu0 0
    %54 = vperm.xlu0 %53, %v50
    %v55 = vpop.permute.xlu0 %54
    %vm56 = vcmp.eq.s32.totalorder %v52, %v55
    %v57 = vsel %vm56, 1, 0
    %v58 = vcvt.s32.f32 %v57
    %v59 = vld [vmem:[#allocation2] sm:$0xff]
    %v60 = vld [vmem:[#allocation2 + $0x8] sm:$0xff]
    %v61 = vld [vmem:[#allocation2 + $0x10] sm:$0xff]
    %v62 = vld [vmem:[#allocation2 + $0x18] sm:$0xff]
    %v64 = vsel %vm31, %v58, 0
    %66 = vmatprep.subr.mxu0 0.0
    %67 = vmatpush1.msra.mxu0 0.0
    %68 = vmatprep.subr.mxu0 0.0
    %69 = vmatpush1.msra.mxu0 0.0
    %70 = vmatprep.subr.mxu0 0.0
    %71 = vmatpush1.msra.mxu0 0.0
    %72 = vmatprep.subr.mxu0 0.0
    %73 = vmatpush1.msra.mxu0 0.0
    %74 = vmatprep.subr.mxu0 0.0
    %75 = vmatpush1.msra.mxu0 0.0
    %76 = vmatprep.subr.mxu0 0.0
    %77 = vmatpush1.msra.mxu0 0.0
    %78 = vmatprep.subr.mxu0 0.0
    %79 = vmatpush1.msra.mxu0 0.0
    %80 = vmatprep.subr.mxu0 0.0
    %81 = vmatpush1.msra.mxu0 0.0
    %82 = vmatprep.subr.mxu0 0.0
    %83 = vmatpush1.msra.mxu0 0.0
    %84 = vmatprep.subr.mxu0 0.0
    %85 = vmatpush1.msra.mxu0 0.0
    %86 = vmatprep.subr.mxu0 0.0
    %87 = vmatpush1.msra.mxu0 0.0
    %88 = vmatprep.subr.mxu0 0.0
    %89 = vmatpush1.msra.mxu0 0.0
    %90 = vmatprep.subr.mxu0 0.0
    %91 = vmatpush1.msra.mxu0 %v62
    %92 = vmatprep.subr.mxu0 0.0
    %93 = vmatpush1.msra.mxu0 %v61
    %94 = vmatprep.subr.mxu0 0.0
    %95 = vmatpush1.msra.mxu0 %v60
    %96 = vmatprep.subr.mxu0 0.0
    %97 = vmatpush1.msra.mxu0 %v59
    %98 = vmatprep.subr.mxu0 0.0
    %99 = vmatpush2.msra.mxu0 0.0
    %100 = vmatprep.subr.mxu0 0.0
    %101 = vmatpush2.msra.mxu0 0.0
    %102 = vmatprep.subr.mxu0 0.0
    %103 = vmatpush2.msra.mxu0 0.0
    %104 = vmatprep.subr.mxu0 0.0
    %105 = vmatpush2.msra.mxu0 0.0
    %106 = vmatprep.subr.mxu0 0.0
    %107 = vmatpush2.msra.mxu0 0.0
    %108 = vmatprep.subr.mxu0 0.0
    %109 = vmatpush2.msra.mxu0 0.0
    %110 = vmatprep.subr.mxu0 0.0
    %111 = vmatpush2.msra.mxu0 0.0
    %112 = vmatprep.subr.mxu0 0.0
    %113 = vmatpush2.msra.mxu0 0.0
    %114 = vmatprep.subr.mxu0 0.0
    %115 = vmatpush2.msra.mxu0 0.0
    %116 = vmatprep.subr.mxu0 0.0
    %117 = vmatpush2.msra.mxu0 0.0
    %118 = vmatprep.subr.mxu0 0.0
    %119 = vmatpush2.msra.mxu0 0.0
    %120 = vmatprep.subr.mxu0 0.0
    %121 = vmatpush2.msra.mxu0 0.0
    %122 = vmatprep.subr.mxu0 0.0
    %123 = vmatpush2.msra.mxu0 0.0
    %124 = vmatprep.subr.mxu0 0.0
    %125 = vmatpush2.msra.mxu0 0.0
    %126 = vmatprep.subr.mxu0 0.0
    %127 = vmatpush2.msra.mxu0 0.0
    %128 = vmatprep.subr.mxu0 0.0
    %129 = vmatpush2.msra.mxu0 0.0
    %130 = vmatprep.mubr.f32.mxu0 0.0
    %131 = vmatmul.mubr.f32.gmra.mxu0 %v64
    %v132 = vpop.f32.mrf.mxu0
    %v133 = vadd.f32 0.0, %v132
    %v134 = vpop.f32.mrf.mxu0
    %135 = vdwg.mxu0
    %v136 = vmul.f32 %v49, %v133
    %v137 = vsel %vm31, %v136, 0.0
    %138 = vadd.xlane.f32.xlu0 %v137
    %v139 = vpop.xlane.xlu0 %138
    %v140 = vrot.slane %v139, 4
    %v141 = vadd.f32 %v139, %v140
    %v142 = vrot.slane %v141, 2
    %v143 = vadd.f32 %v141, %v142
    %v144 = vrot.slane %v143, 1
    %v145 = vadd.f32 %v143, %v144
    %s146 = vtos %v145
    %s147 = smul.f32 %s146, -0.00012207031
    %v148 = vstv %s147
    %149 = vst [vmem:[#allocation5] sm:$0xff] %v148
    // Predicated region
    $region18: #{tpu_custom_call.1} parent=1 // pred_check
      _
    $region19: #{tpu_custom_call.1} parent=1 // pred_check_branch
      %151 = sbr.rel (0) target = $region21
    $region20: #{tpu_custom_call.1} parent=1 // pred_region
      %s153 = ssub.s32 128, 128
      %154 = vsyncadd [#allocation4], %s153
      %s156 = sshll.u32 [#allocation5], 4
      %s157 = int_to_ptr.vmem [resolvable:$true] %s156
      %159 = dma.vmem_to_hbm [thread:$0]  %s157, 128, %s3, [#allocation4]
    $region21: #{tpu_custom_call.1} parent=1 // pred_fallthru
      _
    // Predicated region
    $region22: #{tpu_custom_call.1} parent=1 // pred_check
      _
    $region23: #{tpu_custom_call.1} parent=1 // pred_check_branch
      %161 = sbr.rel (0) target = $region25
    $region24: #{tpu_custom_call.1} parent=1 // pred_region
      %162 = dma.done [#allocation4], 128
    $region25: #{tpu_custom_call.1} parent=1 // pred_fallthru
      _
    %163 = vsyncpa [#allocation3], 1
    %164 = vsyncpa [#allocation4], 1

</llo_original>
